<compile_context>
chip_gen: v6e
topology: v6e:2x2x1
jax: 0.10.0
libtpu: 0.0.40
codegen_flags: <defaults>
</compile_context>

<pallas_src>
import math

import jax
import jax.numpy as jnp
from jax.experimental import pallas as pl
from jax.experimental.pallas import tpu as pltpu

_LANE = 128
_TM_CAP = 16384            # diminishing returns beyond this (multi-MiB blocks)
_MIN_MEGACORE_ROWS = 4096  # per-TC tile must still amortize ~0.35us/step


def _round_up(x, m):
    return ((x + m - 1) // m) * m


def _vmem_limit_bytes():
    """Generation-aware scoped-VMEM limit (leave ~25% headroom for the compiler)."""
    try:
        cap = int(pltpu.get_tpu_info().vmem_capacity_bytes)
    except Exception:
        cap = 64 << 20  # conservative fallback (v7x physical VMEM)
    return min((cap * 3) // 4, 96 << 20)   # v7x: 48 MiB, v5e/v6e: 96 MiB


def _pick_tm(batch, x_itemsize, out_itemsize, align, tm_request, vmem_limit_bytes):
    """Lane-padded VMEM accounting for the per-step tile height."""
    # Every row of x / out / h1 / h2 / logits occupies >= one full 128-lane tile
    # row in VMEM regardless of the true feature width (32 / 10 / 64 / 32 / nc).
    # x and out blocks are double-buffered by the pipeline; the three f32
    # intermediates are single-buffered.
    per_row = (2 * _LANE * x_itemsize          # x block (double-buffered)
               + 2 * _LANE * out_itemsize      # out block (double-buffered)
               + 3 * _LANE * 4)                # h1 / h2 / logits f32 temporaries
    budget = max(per_row * align, vmem_limit_bytes - (4 << 20))  # headroom: weights/scratch
    tm_vmem = max(align, (budget // per_row) // align * align)

    tm = tm_vmem if tm_request is None else tm_request
    tm = min(tm, tm_vmem, _TM_CAP)

    # v7x megacore: keep >= 2 grid steps so the "parallel" axis shards across
    # both TensorCores, as long as each half still amortizes step overhead.
    if batch >= 2 * _MIN_MEGACORE_ROWS:
        tm = min(tm, _round_up((batch + 1) // 2, align))

    if tm >= batch:
        return batch                      # single full block; no masking needed
    return max(align, (tm // align) * align)


def mlp_kernel(x_ref, w1_ref, b1_ref, w2_ref, b2_ref, w3_ref, b3_ref, o_ref):
    # Hoist bias loads (read once per grid step; broadcast handled by VPU add).
    b1 = b1_ref[...]
    b2 = b2_ref[...]
    b3 = b3_ref[...]

    # Layer 1: Linear + ReLU (MXU matmul, f32 accumulate; bias/ReLU in f32).
    h1 = jnp.dot(x_ref[...], w1_ref[...], preferred_element_type=jnp.float32)
    h1 = jnp.maximum(h1 + b1, 0.0)

    # Layer 2: Linear + ReLU (cast activation to weight dtype only at MXU input).
    h2 = jnp.dot(h1.astype(w2_ref.dtype), w2_ref[...],
                 preferred_element_type=jnp.float32)
    h2 = jnp.maximum(h2 + b2, 0.0)

    # Layer 3: Linear (logits, no activation).
    out = jnp.dot(h2.astype(w3_ref.dtype), w3_ref[...],
                  preferred_element_type=jnp.float32)
    o_ref[...] = (out + b3).astype(o_ref.dtype)


def simple_nn_forward(x, params, *, tm=None, out_dtype=None):
    """Fused 3-layer MLP. Batch is tiled with a 1-D grid; weights/biases stay
    VMEM-resident across the whole grid (constant index_maps). No wrapper-side
    padding: the partial last block (if any) is masked by Pallas."""
    w1, b1, w2, b2, w3, b3 = params
    batch, input_dim = x.shape
    num_classes = w3.shape[1]
    out_dtype = x.dtype if out_dtype is None else out_dtype

    # Sublane alignment: 8 rows for f32 tiles, 16 for bf16-packed tiles.
    align = 16 if (x.dtype == jnp.bfloat16 or out_dtype == jnp.bfloat16) else 8
    vmem_limit = _vmem_limit_bytes()
    tm = _pick_tm(batch, x.dtype.itemsize, jnp.dtype(out_dtype).itemsize,
                  align, tm, vmem_limit)
    grid = (pl.cdiv(batch, tm),)

    flops = 2 * batch * (input_dim * 64 + 64 * 32 + 32 * num_classes)
    bytes_accessed = (
        batch * input_dim * x.dtype.itemsize                    # read x
        + batch * num_classes * jnp.dtype(out_dtype).itemsize   # write logits
        + sum(int(math.prod(p.shape)) * p.dtype.itemsize for p in params)
    )

    return pl.pallas_call(
        mlp_kernel,
        out_shape=jax.ShapeDtypeStruct((batch, num_classes), out_dtype),
        grid=grid,
        in_specs=[
            # x: tiled over batch (double-buffered by the pipeline).
            pl.BlockSpec((tm, input_dim), lambda i: (i, 0)),
            # Weights / biases: full-array blocks, constant index -> VMEM-resident.
            pl.BlockSpec((input_dim, 64), lambda i: (0, 0)),
            pl.BlockSpec((1, 64), lambda i: (0, 0)),
            pl.BlockSpec((64, 32), lambda i: (0, 0)),
            pl.BlockSpec((1, 32), lambda i: (0, 0)),
            pl.BlockSpec((32, num_classes), lambda i: (0, 0)),
            pl.BlockSpec((1, num_classes), lambda i: (0, 0)),
        ],
        out_specs=pl.BlockSpec((tm, num_classes), lambda i: (i, 0)),
        compiler_params=pltpu.CompilerParams(
            dimension_semantics=("parallel",),   # shard batch across TCs (v7x)
            vmem_limit_bytes=vmem_limit,
        ),
        cost_estimate=pl.CostEstimate(
            flops=flops, transcendentals=0, bytes_accessed=bytes_accessed),
    )(x, w1, b1, w2, b2, w3, b3)


def init_params(key, input_dim, num_classes, dtype=jnp.float32):
    """Deterministic init mimicking torch.nn.Linear default:
    U(-1/sqrt(fan_in), 1/sqrt(fan_in)) for both weight and bias.
    Weights stored as (in, out) == transposed PyTorch weight, cast to `dtype`.
    Biases kept in f32 (post-matmul math stays f32)."""
    dims = [(input_dim, 64), (64, 32), (32, num_classes)]
    params = []
    for fan_in, fan_out in dims:
        key, kw, kb = jax.random.split(key, 3)
        bound = 1.0 / jnp.sqrt(fan_in)
        w = jax.random.uniform(kw, (fan_in, fan_out), jnp.float32, -bound, bound)
        b = jax.random.uniform(kb, (1, fan_out), jnp.float32, -bound, bound)
        params += [w.astype(dtype), b]
    return tuple(params)


def reference_forward(x, params):
    w1, b1, w2, b2, w3, b3 = params
    x = x.astype(jnp.float32)
    h1 = jnp.maximum(x @ w1.astype(jnp.float32) + b1, 0.0)
    h2 = jnp.maximum(h1 @ w2.astype(jnp.float32) + b2, 0.0)
    return h2 @ w3.astype(jnp.float32) + b3


if __name__ == "__main__":
    input_dim, num_classes = 32, 10

    # --- Test 1: f32, small batch (single full block, auto tm) ---------------
    key = jax.random.PRNGKey(0)
    key, kx = jax.random.split(key)
    x = jax.random.normal(kx, (8, input_dim), jnp.float32)
    params = init_params(key, input_dim, num_classes, dtype=jnp.float32)

    out = jax.block_until_ready(simple_nn_forward(x, params))
    ref = reference_forward(x, params)
    assert out.shape == (8, num_classes)
    assert out.dtype == jnp.float32
    assert jnp.allclose(out, ref, atol=1e-5, rtol=1e-5)

    # --- Test 2: f32, ragged batch, multi-step grid (masked partial last block) ---
    key2 = jax.random.PRNGKey(0)
    key2, kx2 = jax.random.split(key2)
    x2 = jax.random.normal(kx2, (300, input_dim), jnp.float32)
    params2 = init_params(key2, input_dim, num_classes, dtype=jnp.float32)

    out2 = jax.block_until_ready(simple_nn_forward(x2, params2, tm=128))
    ref2 = reference_forward(x2, params2)
    assert out2.shape == (300, num_classes)
    assert jnp.allclose(out2, ref2, atol=1e-5, rtol=1e-5)

    # --- Test 3: bf16 storage for x / weights / logits, f32 accumulation -----
    key3 = jax.random.PRNGKey(0)
    key3, kx3 = jax.random.split(key3)
    x3 = jax.random.normal(kx3, (64, input_dim), jnp.float32).astype(jnp.bfloat16)
    params3 = init_params(key3, input_dim, num_classes, dtype=jnp.bfloat16)

    out3 = jax.block_until_ready(simple_nn_forward(x3, params3, tm=32))
    ref3 = reference_forward(x3, params3)
    assert out3.shape == (64, num_classes)
    assert out3.dtype == jnp.bfloat16
    assert jnp.allclose(out3.astype(jnp.float32), ref3, atol=3e-2, rtol=3e-2)

    print("KERNEL_OK")
</pallas_src>

<mosaic_0001>
module attributes {stable_mosaic.version = 11 : i64} {
  func.func @mlp_kernel(%arg0: i32, %arg1: memref<8x32xf32, #tpu.memory_space<vmem>>, %arg2: memref<32x64xf32, #tpu.memory_space<vmem>>, %arg3: memref<1x64xf32, #tpu.memory_space<vmem>>, %arg4: memref<64x32xf32, #tpu.memory_space<vmem>>, %arg5: memref<1x32xf32, #tpu.memory_space<vmem>>, %arg6: memref<32x10xf32, #tpu.memory_space<vmem>>, %arg7: memref<1x10xf32, #tpu.memory_space<vmem>>, %arg8: memref<8x10xf32, #tpu.memory_space<vmem>>) attributes {dimension_semantics = [#tpu.dimension_semantics<parallel>], iteration_bounds = array<i64: 1>, scalar_prefetch = 0 : i64, scratch_operands = 0 : i64, tpu.core_type = #tpu.core_type<tc>, window_params = [{transform_indices = @transform_0, window_bounds = array<i64: 8, 32>}, {pipeline_mode = #tpu.pipeline_mode<synchronous>, transform_indices = @transform_1, window_bounds = array<i64: 32, 64>}, {pipeline_mode = #tpu.pipeline_mode<synchronous>, transform_indices = @transform_2, window_bounds = array<i64: 1, 64>}, {pipeline_mode = #tpu.pipeline_mode<synchronous>, transform_indices = @transform_3, window_bounds = array<i64: 64, 32>}, {pipeline_mode = #tpu.pipeline_mode<synchronous>, transform_indices = @transform_4, window_bounds = array<i64: 1, 32>}, {pipeline_mode = #tpu.pipeline_mode<synchronous>, transform_indices = @transform_5, window_bounds = array<i64: 32, 10>}, {pipeline_mode = #tpu.pipeline_mode<synchronous>, transform_indices = @transform_6, window_bounds = array<i64: 1, 10>}, {transform_indices = @transform_7, window_bounds = array<i64: 8, 10>}]} {
    %c0 = arith.constant 0 : index
    %c0_0 = arith.constant 0 : index
    %0 = vector.load %arg3[%c0, %c0_0] : memref<1x64xf32, #tpu.memory_space<vmem>>, vector<1x64xf32>
    %c0_1 = arith.constant 0 : index
    %c0_2 = arith.constant 0 : index
    %1 = vector.load %arg5[%c0_1, %c0_2] : memref<1x32xf32, #tpu.memory_space<vmem>>, vector<1x32xf32>
    %c0_3 = arith.constant 0 : index
    %c0_4 = arith.constant 0 : index
    %2 = vector.load %arg7[%c0_3, %c0_4] : memref<1x10xf32, #tpu.memory_space<vmem>>, vector<1x10xf32>
    %c0_5 = arith.constant 0 : index
    %c0_6 = arith.constant 0 : index
    %3 = vector.load %arg1[%c0_5, %c0_6] : memref<8x32xf32, #tpu.memory_space<vmem>>, vector<8x32xf32>
    %c0_7 = arith.constant 0 : index
    %c0_8 = arith.constant 0 : index
    %4 = vector.load %arg2[%c0_7, %c0_8] : memref<32x64xf32, #tpu.memory_space<vmem>>, vector<32x64xf32>
    %cst = arith.constant dense<0.000000e+00> : vector<8x64xf32>
    %5 = tpu.matmul %3, %4, %cst {dimension_numbers = #tpu.dot_dimension_numbers<[1], [0], [0], [1], [0, 0, 1, 1], [], []>} : vector<8x32xf32>, vector<32x64xf32>, vector<8x64xf32> -> vector<8x64xf32>
    %6 = vector.broadcast %0 : vector<1x64xf32> to vector<8x64xf32>
    %7 = arith.addf %5, %6 : vector<8x64xf32>
    %cst_9 = arith.constant 0.000000e+00 : f32
    %8 = vector.broadcast %cst_9 : f32 to vector<8x64xf32>
    %9 = arith.maximumf %7, %8 : vector<8x64xf32>
    %c0_10 = arith.constant 0 : index
    %c0_11 = arith.constant 0 : index
    %10 = vector.load %arg4[%c0_10, %c0_11] : memref<64x32xf32, #tpu.memory_space<vmem>>, vector<64x32xf32>
    %cst_12 = arith.constant dense<0.000000e+00> : vector<8x32xf32>
    %11 = tpu.matmul %9, %10, %cst_12 {dimension_numbers = #tpu.dot_dimension_numbers<[1], [0], [0], [1], [0, 0, 1, 1], [], []>} : vector<8x64xf32>, vector<64x32xf32>, vector<8x32xf32> -> vector<8x32xf32>
    %12 = vector.broadcast %1 : vector<1x32xf32> to vector<8x32xf32>
    %13 = arith.addf %11, %12 : vector<8x32xf32>
    %cst_13 = arith.constant 0.000000e+00 : f32
    %14 = vector.broadcast %cst_13 : f32 to vector<8x32xf32>
    %15 = arith.maximumf %13, %14 : vector<8x32xf32>
    %c0_14 = arith.constant 0 : index
    %c0_15 = arith.constant 0 : index
    %16 = vector.load %arg6[%c0_14, %c0_15] : memref<32x10xf32, #tpu.memory_space<vmem>>, vector<32x10xf32>
    %cst_16 = arith.constant dense<0.000000e+00> : vector<8x10xf32>
    %17 = tpu.matmul %15, %16, %cst_16 {dimension_numbers = #tpu.dot_dimension_numbers<[1], [0], [0], [1], [0, 0, 1, 1], [], []>} : vector<8x32xf32>, vector<32x10xf32>, vector<8x10xf32> -> vector<8x10xf32>
    %18 = vector.broadcast %2 : vector<1x10xf32> to vector<8x10xf32>
    %19 = arith.addf %17, %18 : vector<8x10xf32>
    %c0_17 = arith.constant 0 : index
    %c0_18 = arith.constant 0 : index
    %20 = vector.load %arg8[%c0_17, %c0_18] : memref<8x10xf32, #tpu.memory_space<vmem>>, vector<8x10xf32>
    tpu.vector_store %arg8[%c0_17, %c0_18], %19 {strides = array<i32>} : memref<8x10xf32, #tpu.memory_space<vmem>>, vector<8x10xf32>,
    return
  }
  func.func @transform_0(%arg0: i32) -> (i32, i32) {
    %c0_i32 = arith.constant 0 : i32
    %c0_i32_0 = arith.constant 0 : i32
    return %arg0, %c0_i32 : i32, i32
  }
  func.func @transform_1(%arg0: i32) -> (i32, i32) {
    %c0_i32 = arith.constant 0 : i32
    %c0_i32_0 = arith.constant 0 : i32
    %c0_i32_1 = arith.constant 0 : i32
    return %c0_i32, %c0_i32_0 : i32, i32
  }
  func.func @transform_2(%arg0: i32) -> (i32, i32) {
    %c0_i32 = arith.constant 0 : i32
    %c0_i32_0 = arith.constant 0 : i32
    %c0_i32_1 = arith.constant 0 : i32
    return %c0_i32, %c0_i32_0 : i32, i32
  }
  func.func @transform_3(%arg0: i32) -> (i32, i32) {
    %c0_i32 = arith.constant 0 : i32
    %c0_i32_0 = arith.constant 0 : i32
    %c0_i32_1 = arith.constant 0 : i32
    return %c0_i32, %c0_i32_0 : i32, i32
  }
  func.func @transform_4(%arg0: i32) -> (i32, i32) {
    %c0_i32 = arith.constant 0 : i32
    %c0_i32_0 = arith.constant 0 : i32
    %c0_i32_1 = arith.constant 0 : i32
    return %c0_i32, %c0_i32_0 : i32, i32
  }
  func.func @transform_5(%arg0: i32) -> (i32, i32) {
    %c0_i32 = arith.constant 0 : i32
    %c0_i32_0 = arith.constant 0 : i32
    %c0_i32_1 = arith.constant 0 : i32
    return %c0_i32, %c0_i32_0 : i32, i32
  }
  func.func @transform_6(%arg0: i32) -> (i32, i32) {
    %c0_i32 = arith.constant 0 : i32
    %c0_i32_0 = arith.constant 0 : i32
    %c0_i32_1 = arith.constant 0 : i32
    return %c0_i32, %c0_i32_0 : i32, i32
  }
  func.func @transform_7(%arg0: i32) -> (i32, i32) {
    %c0_i32 = arith.constant 0 : i32
    %c0_i32_0 = arith.constant 0 : i32
    return %arg0, %c0_i32 : i32, i32
  }
}

</mosaic_0001>

<llo_original>
// kernel: tpu_custom_call.1
$region0: #{tpu_custom_call.1}
  #allocation0 [shape = 'u32[]', space=smem, size = 0x4, offset = 0x4, fixed_abs, tag = 'smem constant byte address 0x4 - core index']
  #allocation1 [shape = 'u32[144,128]{1,0:T(1,128)}', space=vmem, size = 0x12000, scoped, tag = 'internal scratch']
  %s0 = inlined_call_operand.vmem [shape: f32[8,32], index: 0, kind: input, shape index: {}]
  %s1 = inlined_call_operand.vmem [shape: f32[32,64], index: 1, kind: input, shape index: {}]
  %s2 = inlined_call_operand.vmem [shape: f32[1,64], index: 2, kind: input, shape index: {}]
  %s3 = inlined_call_operand.vmem [shape: f32[64,32], index: 3, kind: input, shape index: {}]
  %s4 = inlined_call_operand.vmem [shape: f32[1,32], index: 4, kind: input, shape index: {}]
  %s5 = inlined_call_operand.vmem [shape: f32[32,10], index: 5, kind: input, shape index: {}]
  %s6 = inlined_call_operand.vmem [shape: f32[1,10], index: 6, kind: input, shape index: {}]
  %s7 = inlined_call_operand.hbm [shape: f32[8,10], index: 7, kind: output, shape index: {}]
  %s8 = sld [smem:[#allocation0]]
  $region38: #{tpu_custom_call.1} parent=0
    _
  %s10 = ssub.s32 1, %s8
  %s11 = scalar_select 0, %s10, %s8
  $region1: #{tpu_custom_call.1} parent=0
    #allocation2 [shape = 'u8[4096]{0}', space=vmem, size = 0x1000, scoped, tag = 'output window, operand 0, single buffered']
    #allocation3 [shape = 's32[1]{0}', space=sflag, size = 0x4, scoped, tag = 'scoped memory for tpu_custom_call.1']
    %12 = vsyncpa [#allocation3], 0
    // Predicated region
    $region2: #{tpu_custom_call.1} parent=1 // pred_check
      _
    $region3: #{tpu_custom_call.1} parent=1 // pred_check_branch
      %14 = sbr.rel (0) target = $region5
    $region4: #{tpu_custom_call.1} parent=1 // pred_region
      _
    $region5: #{tpu_custom_call.1} parent=1 // pred_fallthru
      _
    // Predicated region
    $region6: #{tpu_custom_call.1} parent=1 // pred_check
      _
    $region7: #{tpu_custom_call.1} parent=1 // pred_check_branch
      %16 = sbr.rel (0) target = $region9
    $region8: #{tpu_custom_call.1} parent=1 // pred_region
      _
    $region9: #{tpu_custom_call.1} parent=1 // pred_fallthru
      _
    // Predicated region
    $region10: #{tpu_custom_call.1} parent=1 // pred_check
      _
    $region11: #{tpu_custom_call.1} parent=1 // pred_check_branch
      %18 = sbr.rel (0) target = $region13
    $region12: #{tpu_custom_call.1} parent=1 // pred_region
      _
    $region13: #{tpu_custom_call.1} parent=1 // pred_fallthru
      _
    // Predicated region
    $region14: #{tpu_custom_call.1} parent=1 // pred_check
      _
    $region15: #{tpu_custom_call.1} parent=1 // pred_check_branch
      %20 = sbr.rel (0) target = $region17
    $region16: #{tpu_custom_call.1} parent=1 // pred_region
      _
    $region17: #{tpu_custom_call.1} parent=1 // pred_fallthru
      _
    // Predicated region
    $region18: #{tpu_custom_call.1} parent=1 // pred_check
      _
    $region19: #{tpu_custom_call.1} parent=1 // pred_check_branch
      %22 = sbr.rel (0) target = $region21
    $region20: #{tpu_custom_call.1} parent=1 // pred_region
      _
    $region21: #{tpu_custom_call.1} parent=1 // pred_fallthru
      _
    // Predicated region
    $region22: #{tpu_custom_call.1} parent=1 // pred_check
      _
    $region23: #{tpu_custom_call.1} parent=1 // pred_check_branch
      %24 = sbr.rel (0) target = $region25
    $region24: #{tpu_custom_call.1} parent=1 // pred_region
      _
    $region25: #{tpu_custom_call.1} parent=1 // pred_fallthru
      _
    // Predicated region
    $region26: #{tpu_custom_call.1} parent=1 // pred_check
      _
    $region27: #{tpu_custom_call.1} parent=1 // pred_check_branch
      %26 = sbr.rel (0) target = $region29
    $region28: #{tpu_custom_call.1} parent=1 // pred_region
      _
    $region29: #{tpu_custom_call.1} parent=1 // pred_fallthru
      _
    %v27 = vld [vmem:[%s2] sm:$0x1]
    %v28 = vld [vmem:[%s4] sm:$0x1]
    %v29 = vld [vmem:[%s6] sm:$0x1]
    %v30 = vld [vmem:[%s0] sm:$0xff]
    %v31 = vld [vmem:[%s1] sm:$0xff]
    %v32 = vld [vmem:[%s1 + $0x8] sm:$0xff]
    %v33 = vld [vmem:[%s1 + $0x10] sm:$0xff]
    %v34 = vld [vmem:[%s1 + $0x18] sm:$0xff]
    %v36 = vlaneseq
    %v37 = vshrl.u32 %v36, 7
    %v38 = vsub.s32 0, %v37
    %v39 = vrot.slane %v27, %v38
    %vm41 = vcmask 261120
    %v43 = vsel %vm41, %v30, 0
    %45 = vmatprep.subr.mxu0 0.0
    %46 = vmatpush1.msra.mxu0 0.0
    %47 = vmatprep.subr.mxu0 0.0
    %48 = vmatpush1.msra.mxu0 0.0
    %49 = vmatprep.subr.mxu0 0.0
    %50 = vmatpush1.msra.mxu0 0.0
    %51 = vmatprep.subr.mxu0 0.0
    %52 = vmatpush1.msra.mxu0 0.0
    %53 = vmatprep.subr.mxu0 0.0
    %54 = vmatpush1.msra.mxu0 0.0
    %55 = vmatprep.subr.mxu0 0.0
    %56 = vmatpush1.msra.mxu0 0.0
    %57 = vmatprep.subr.mxu0 0.0
    %58 = vmatpush1.msra.mxu0 0.0
    %59 = vmatprep.subr.mxu0 0.0
    %60 = vmatpush1.msra.mxu0 0.0
    %61 = vmatprep.subr.mxu0 0.0
    %62 = vmatpush1.msra.mxu0 0.0
    %63 = vmatprep.subr.mxu0 0.0
    %64 = vmatpush1.msra.mxu0 0.0
    %65 = vmatprep.subr.mxu0 0.0
    %66 = vmatpush1.msra.mxu0 0.0
    %67 = vmatprep.subr.mxu0 0.0
    %68 = vmatpush1.msra.mxu0 0.0
    %69 = vmatprep.subr.mxu0 0.0
    %70 = vmatpush1.msra.mxu0 %v34
    %71 = vmatprep.subr.mxu0 0.0
    %72 = vmatpush1.msra.mxu0 %v33
    %73 = vmatprep.subr.mxu0 0.0
    %74 = vmatpush1.msra.mxu0 %v32
    %75 = vmatprep.subr.mxu0 0.0
    %76 = vmatpush1.msra.mxu0 %v31
    %77 = vmatprep.subr.mxu0 0.0
    %78 = vmatpush2.msra.mxu0 0.0
    %79 = vmatprep.subr.mxu0 0.0
    %80 = vmatpush2.msra.mxu0 0.0
    %81 = vmatprep.subr.mxu0 0.0
    %82 = vmatpush2.msra.mxu0 0.0
    %83 = vmatprep.subr.mxu0 0.0
    %84 = vmatpush2.msra.mxu0 0.0
    %85 = vmatprep.subr.mxu0 0.0
    %86 = vmatpush2.msra.mxu0 0.0
    %87 = vmatprep.subr.mxu0 0.0
    %88 = vmatpush2.msra.mxu0 0.0
    %89 = vmatprep.subr.mxu0 0.0
    %90 = vmatpush2.msra.mxu0 0.0
    %91 = vmatprep.subr.mxu0 0.0
    %92 = vmatpush2.msra.mxu0 0.0
    %93 = vmatprep.subr.mxu0 0.0
    %94 = vmatpush2.msra.mxu0 0.0
    %95 = vmatprep.subr.mxu0 0.0
    %96 = vmatpush2.msra.mxu0 0.0
    %97 = vmatprep.subr.mxu0 0.0
    %98 = vmatpush2.msra.mxu0 0.0
    %99 = vmatprep.subr.mxu0 0.0
    %100 = vmatpush2.msra.mxu0 0.0
    %101 = vmatprep.subr.mxu0 0.0
    %102 = vmatpush2.msra.mxu0 0.0
    %103 = vmatprep.subr.mxu0 0.0
    %104 = vmatpush2.msra.mxu0 0.0
    %105 = vmatprep.subr.mxu0 0.0
    %106 = vmatpush2.msra.mxu0 0.0
    %107 = vmatprep.subr.mxu0 0.0
    %108 = vmatpush2.msra.mxu0 0.0
    %109 = vmatprep.mubr.f32.mxu0 0.0
    %110 = vmatmul.mubr.f32.gmra.mxu0 %v43
    %v111 = vpop.f32.mrf.mxu0
    %v112 = vadd.f32 %v39, %v111
    %v113 = vpop.f32.mrf.mxu0
    %114 = vdwg.mxu0
    %v115 = vmax.f32 %v112, 0.0
    %v116 = vld [vmem:[%s3] sm:$0xff]
    %v117 = vld [vmem:[%s3 + $0x8] sm:$0xff]
    %v118 = vld [vmem:[%s3 + $0x10] sm:$0xff]
    %v119 = vld [vmem:[%s3 + $0x18] sm:$0xff]
    %v120 = vld [vmem:[%s3 + $0x20] sm:$0xff]
    %v121 = vld [vmem:[%s3 + $0x28] sm:$0xff]
    %v122 = vld [vmem:[%s3 + $0x30] sm:$0xff]
    %v123 = vld [vmem:[%s3 + $0x38] sm:$0xff]
    %v125 = vlaneseq
    %v126 = vshrl.u32 %v125, 7
    %v127 = vsub.s32 0, %v126
    %v128 = vrot.slane %v28, %v127
    %vm130 = vcmask 523264
    %v132 = vsel %vm130, %v115, 0
    %134 = vmatprep.subr.mxu0 0.0
    %135 = vmatpush1.msra.mxu0 0.0
    %136 = vmatprep.subr.mxu0 0.0
    %137 = vmatpush1.msra.mxu0 0.0
    %138 = vmatprep.subr.mxu0 0.0
    %139 = vmatpush1.msra.mxu0 0.0
    %140 = vmatprep.subr.mxu0 0.0
    %141 = vmatpush1.msra.mxu0 0.0
    %142 = vmatprep.subr.mxu0 0.0
    %143 = vmatpush1.msra.mxu0 0.0
    %144 = vmatprep.subr.mxu0 0.0
    %145 = vmatpush1.msra.mxu0 0.0
    %146 = vmatprep.subr.mxu0 0.0
    %147 = vmatpush1.msra.mxu0 0.0
    %148 = vmatprep.subr.mxu0 0.0
    %149 = vmatpush1.msra.mxu0 0.0
    %150 = vmatprep.subr.mxu0 0.0
    %151 = vmatpush1.msra.mxu0 %v123
    %152 = vmatprep.subr.mxu0 0.0
    %153 = vmatpush1.msra.mxu0 %v122
    %154 = vmatprep.subr.mxu0 0.0
    %155 = vmatpush1.msra.mxu0 %v121
    %156 = vmatprep.subr.mxu0 0.0
    %157 = vmatpush1.msra.mxu0 %v120
    %158 = vmatprep.subr.mxu0 0.0
    %159 = vmatpush1.msra.mxu0 %v119
    %160 = vmatprep.subr.mxu0 0.0
    %161 = vmatpush1.msra.mxu0 %v118
    %162 = vmatprep.subr.mxu0 0.0
    %163 = vmatpush1.msra.mxu0 %v117
    %164 = vmatprep.subr.mxu0 0.0
    %165 = vmatpush1.msra.mxu0 %v116
    %166 = vmatprep.subr.mxu0 0.0
    %167 = vmatpush2.msra.mxu0 0.0
    %168 = vmatprep.subr.mxu0 0.0
    %169 = vmatpush2.msra.mxu0 0.0
    %170 = vmatprep.subr.mxu0 0.0
    %171 = vmatpush2.msra.mxu0 0.0
    %172 = vmatprep.subr.mxu0 0.0
    %173 = vmatpush2.msra.mxu0 0.0
    %174 = vmatprep.subr.mxu0 0.0
    %175 = vmatpush2.msra.mxu0 0.0
    %176 = vmatprep.subr.mxu0 0.0
    %177 = vmatpush2.msra.mxu0 0.0
    %178 = vmatprep.subr.mxu0 0.0
    %179 = vmatpush2.msra.mxu0 0.0
    %180 = vmatprep.subr.mxu0 0.0
    %181 = vmatpush2.msra.mxu0 0.0
    %182 = vmatprep.subr.mxu0 0.0
    %183 = vmatpush2.msra.mxu0 0.0
    %184 = vmatprep.subr.mxu0 0.0
    %185 = vmatpush2.msra.mxu0 0.0
    %186 = vmatprep.subr.mxu0 0.0
    %187 = vmatpush2.msra.mxu0 0.0
    %188 = vmatprep.subr.mxu0 0.0
    %189 = vmatpush2.msra.mxu0 0.0
    %190 = vmatprep.subr.mxu0 0.0
    %191 = vmatpush2.msra.mxu0 0.0
    %192 = vmatprep.subr.mxu0 0.0
    %193 = vmatpush2.msra.mxu0 0.0
    %194 = vmatprep.subr.mxu0 0.0
    %195 = vmatpush2.msra.mxu0 0.0
    %196 = vmatprep.subr.mxu0 0.0
    %197 = vmatpush2.msra.mxu0 0.0
    %198 = vmatprep.mubr.f32.mxu0 0.0
    %199 = vmatmul.mubr.f32.gmra.mxu0 %v132
    %v200 = vpop.f32.mrf.mxu0
    %v201 = vadd.f32 %v128, %v200
    %v202 = vpop.f32.mrf.mxu0
    %203 = vdwg.mxu0
    %v204 = vmax.f32 %v201, 0.0
    %v205 = vld [vmem:[%s5] sm:$0xff]
    %v206 = vld [vmem:[%s5 + $0x8] sm:$0xff]
    %v207 = vld [vmem:[%s5 + $0x10] sm:$0xff]
    %v208 = vld [vmem:[%s5 + $0x18] sm:$0xff]
    %v210 = vlaneseq
    %v211 = vshrl.u32 %v210, 7
    %v212 = vsub.s32 0, %v211
    %v213 = vrot.slane %v29, %v212
    %v216 = vsel %vm41, %v204, 0
    %218 = vmatprep.subr.mxu0 0.0
    %219 = vmatpush1.msra.mxu0 0.0
    %220 = vmatprep.subr.mxu0 0.0
    %221 = vmatpush1.msra.mxu0 0.0
    %222 = vmatprep.subr.mxu0 0.0
    %223 = vmatpush1.msra.mxu0 0.0
    %224 = vmatprep.subr.mxu0 0.0
    %225 = vmatpush1.msra.mxu0 0.0
    %226 = vmatprep.subr.mxu0 0.0
    %227 = vmatpush1.msra.mxu0 0.0
    %228 = vmatprep.subr.mxu0 0.0
    %229 = vmatpush1.msra.mxu0 0.0
    %230 = vmatprep.subr.mxu0 0.0
    %231 = vmatpush1.msra.mxu0 0.0
    %232 = vmatprep.subr.mxu0 0.0
    %233 = vmatpush1.msra.mxu0 0.0
    %234 = vmatprep.subr.mxu0 0.0
    %235 = vmatpush1.msra.mxu0 0.0
    %236 = vmatprep.subr.mxu0 0.0
    %237 = vmatpush1.msra.mxu0 0.0
    %238 = vmatprep.subr.mxu0 0.0
    %239 = vmatpush1.msra.mxu0 0.0
    %240 = vmatprep.subr.mxu0 0.0
    %241 = vmatpush1.msra.mxu0 0.0
    %242 = vmatprep.subr.mxu0 0.0
    %243 = vmatpush1.msra.mxu0 %v208
    %244 = vmatprep.subr.mxu0 0.0
    %245 = vmatpush1.msra.mxu0 %v207
    %246 = vmatprep.subr.mxu0 0.0
    %247 = vmatpush1.msra.mxu0 %v206
    %248 = vmatprep.subr.mxu0 0.0
    %249 = vmatpush1.msra.mxu0 %v205
    %250 = vmatprep.subr.mxu0 0.0
    %251 = vmatpush2.msra.mxu0 0.0
    %252 = vmatprep.subr.mxu0 0.0
    %253 = vmatpush2.msra.mxu0 0.0
    %254 = vmatprep.subr.mxu0 0.0
    %255 = vmatpush2.msra.mxu0 0.0
    %256 = vmatprep.subr.mxu0 0.0
    %257 = vmatpush2.msra.mxu0 0.0
    %258 = vmatprep.subr.mxu0 0.0
    %259 = vmatpush2.msra.mxu0 0.0
    %260 = vmatprep.subr.mxu0 0.0
    %261 = vmatpush2.msra.mxu0 0.0
    %262 = vmatprep.subr.mxu0 0.0
    %263 = vmatpush2.msra.mxu0 0.0
    %264 = vmatprep.subr.mxu0 0.0
    %265 = vmatpush2.msra.mxu0 0.0
    %266 = vmatprep.subr.mxu0 0.0
    %267 = vmatpush2.msra.mxu0 0.0
    %268 = vmatprep.subr.mxu0 0.0
    %269 = vmatpush2.msra.mxu0 0.0
    %270 = vmatprep.subr.mxu0 0.0
    %271 = vmatpush2.msra.mxu0 0.0
    %272 = vmatprep.subr.mxu0 0.0
    %273 = vmatpush2.msra.mxu0 0.0
    %274 = vmatprep.subr.mxu0 0.0
    %275 = vmatpush2.msra.mxu0 0.0
    %276 = vmatprep.subr.mxu0 0.0
    %277 = vmatpush2.msra.mxu0 0.0
    %278 = vmatprep.subr.mxu0 0.0
    %279 = vmatpush2.msra.mxu0 0.0
    %280 = vmatprep.subr.mxu0 0.0
    %281 = vmatpush2.msra.mxu0 0.0
    %282 = vmatprep.mubr.f32.mxu0 0.0
    %283 = vmatmul.mubr.f32.gmra.mxu0 %v216
    %v284 = vpop.f32.mrf.mxu0
    %v285 = vadd.f32 %v213, %v284
    %v286 = vpop.f32.mrf.mxu0
    %287 = vdwg.mxu0
    %vm288 = vcmask 80896
    %289 = vst.msk [vmem:[#allocation2] sm:$0xff] %vm288, %v285
    // Predicated region
    $region30: #{tpu_custom_call.1} parent=1 // pred_check
      _
    $region31: #{tpu_custom_call.1} parent=1 // pred_check_branch
      %291 = sbr.rel (0) target = $region33
    $region32: #{tpu_custom_call.1} parent=1 // pred_region
      %s293 = ssub.s32 128, 128
      %294 = vsyncadd [#allocation3], %s293
      %s296 = sshll.u32 [#allocation2], 4
      %s297 = int_to_ptr.vmem [resolvable:$true] %s296
      %299 = dma.vmem_to_hbm [thread:$0]  %s297, 128, %s7, [#allocation3]
    $region33: #{tpu_custom_call.1} parent=1 // pred_fallthru
      _
    // Predicated region
    $region34: #{tpu_custom_call.1} parent=1 // pred_check
      _
    $region35: #{tpu_custom_call.1} parent=1 // pred_check_branch
      %301 = sbr.rel (0) target = $region37
    $region36: #{tpu_custom_call.1} parent=1 // pred_region
      %302 = dma.done [#allocation3], 128
    $region37: #{tpu_custom_call.1} parent=1 // pred_fallthru
      _
    %303 = vsyncpa [#allocation3], 1

</llo_original>
